<compile_context>
chip_gen: v7x
topology: tpu7x:2x2x1
jax: 0.10.0
libtpu: 0.0.40
codegen_flags: <defaults>
</compile_context>

<pallas_src>
import functools
import math

import jax
import jax.numpy as jnp
from jax import lax
from jax.experimental import pallas as pl
from jax.experimental.pallas import tpu as pltpu


def bert_embeddings_kernel(
    ids_ref,      # SMEM  (B*S,) int32            flattened token ids (scalar prefetch)
    tt_ref,       # VMEM  (1, TILE, 1) int32      token type ids for this tile
    word_hbm,     # ANY   (V, H)                  word embedding table (row gather)
    pos_ref,      # VMEM  (P, H)                  position table (fully resident)
    typ_ref,      # VMEM  (T, H)                  token type table (tiny)
    w_ref,        # VMEM  (1, H)                  LayerNorm weight
    b_ref,        # VMEM  (1, H)                  LayerNorm bias
    out_ref,      # VMEM  (TILE, H)
    gather_buf,   # VMEM scratch (TILE, H), word-table dtype
    dma_sem,      # DMA semaphore (1,)            accumulates all TILE row copies
    *,
    tile_s, tiles_per_row, num_types, eps, unroll,
):
    n = pl.program_id(0)
    H = out_ref.shape[-1]
    base = n * tile_s

    # ---- word-embedding row gather: issue ALL tile_s row DMAs up front, one
    # accumulating semaphore; unrolled by `unroll` rows for scheduler visibility.
    # All SMEM id reads happen before the wait below.
    @pl.loop(0, tile_s // unroll)
    def _issue(j):
        j0 = pl.multiple_of(j * unroll, unroll)
        for u in range(unroll):
            i = j0 + u
            tok = ids_ref[base + i]
            pltpu.make_async_copy(
                word_hbm.at[pl.ds(tok, 1), :],
                gather_buf.at[pl.ds(i, 1), :],
                dma_sem.at[0],
            ).start()

    # Drain: each row copy signals H*itemsize bytes on dma_sem[0]; a wait whose
    # descriptor covers the whole (tile_s, H) buffer (same dtype as every row copy)
    # decrements exactly the accumulated total.  Keep this descriptor in sync with
    # the per-row copies above if the gather dst shape/dtype ever changes.
    pltpu.make_async_copy(gather_buf, gather_buf, dma_sem.at[0]).wait()

    words = gather_buf[...].astype(jnp.float32)                 # (TILE, H)

    # ---- position rows for this tile (table stays VMEM-resident; no per-tile DMA) ----
    row0 = (n % tiles_per_row) * tile_s
    if tile_s % 8 == 0:
        row0 = pl.multiple_of(row0, tile_s)
    pos = pos_ref[pl.ds(row0, tile_s), :].astype(jnp.float32)   # (TILE, H)

    # ---- token-type embedding via VPU select (T is tiny, typically 2) ----
    tt = tt_ref[0]                                              # (TILE, 1) int32
    types = jnp.broadcast_to(typ_ref[0, :].astype(jnp.float32), (tile_s, H))
    for t in range(1, num_types):
        types = jnp.where(tt == t, typ_ref[t, :].astype(jnp.float32)[None, :], types)

    emb = words + pos + types                                   # (TILE, H) f32

    # ---- TF-style LayerNorm (eps inside the sqrt); rsqrt on the EUP ----
    u = jnp.mean(emb, axis=-1, keepdims=True)
    d = emb - u
    s = jnp.mean(d * d, axis=-1, keepdims=True)
    x = d * lax.rsqrt(s + eps)
    out = w_ref[0, :].astype(jnp.float32) * x + b_ref[0, :].astype(jnp.float32)

    # dropout: identity (eval mode)
    out_ref[...] = out.astype(out_ref.dtype)


def _pick_tile_s(B, S, max_tile=1024):
    """Largest multiple-of-8 divisor of S (<= max_tile), keeping >= 2 grid steps."""
    cands = [c for c in range(8, min(S, max_tile) + 1, 8) if S % c == 0]
    if not cands:
        return S                                    # whole sequence per tile (fallback)
    tile = max(cands)
    if (B * S) // tile < 2:                         # keep both v7x TensorCores busy
        smaller = [c for c in cands if (B * S) // c >= 2]
        if smaller:
            tile = max(smaller)
    return tile


def bert_embeddings(input_ids, token_type_ids, word_table, pos_table,
                    type_table, ln_weight, ln_bias, *, eps=1e-12,
                    tile_s=None, out_dtype=jnp.float32):
    B, S = input_ids.shape
    V, H = word_table.shape
    P = pos_table.shape[0]
    T = type_table.shape[0]
    assert P >= S, "max_position_embeddings must cover the sequence length"

    if token_type_ids is None:
        token_type_ids = jnp.zeros_like(input_ids)

    if tile_s is None:
        tile_s = _pick_tile_s(B, S)
    assert S % tile_s == 0, "tile_s must divide the sequence length"
    N = B * S
    if tile_s % 8 != 0 and tile_s != N:
        raise ValueError(
            f"seq_len={S} has no multiple-of-8 tile dividing it; pad S to a "
            f"multiple of 8 (or run with batch=1 so the whole flattened batch "
            f"forms a single tile).")

    tiles_per_row = S // tile_s
    num_tiles = B * tiles_per_row
    unroll = math.gcd(tile_s, 8)

    ids_flat = input_ids.reshape(N).astype(jnp.int32)
    tt_col = token_type_ids.reshape(num_tiles, tile_s, 1).astype(jnp.int32)

    kernel = functools.partial(
        bert_embeddings_kernel,
        tile_s=tile_s, tiles_per_row=tiles_per_row, num_types=T, eps=eps,
        unroll=unroll)

    # VMEM budget: gather scratch + resident pos table + double-buffered out/tt/consts.
    wbytes = jnp.dtype(word_table.dtype).itemsize
    pbytes = jnp.dtype(pos_table.dtype).itemsize
    obytes = jnp.dtype(out_dtype).itemsize
    vmem_est = (tile_s * H * wbytes
                + 2 * P * H * pbytes
                + 2 * tile_s * H * obytes
                + 2 * T * H * 4 + 4 * H * 4 + 2 * tile_s * 4)
    vmem_limit = int(min(100 * 2**20, max(2 * vmem_est, 16 * 2**20)))

    out_flat = pl.pallas_call(
        kernel,
        out_shape=jax.ShapeDtypeStruct((N, H), out_dtype),
        grid_spec=pltpu.PrefetchScalarGridSpec(
            num_scalar_prefetch=1,                 # ids -> SMEM
            grid=(num_tiles,),
            in_specs=[
                pl.BlockSpec((1, tile_s, 1), lambda n, ids: (n, 0, 0)),   # token types
                pl.BlockSpec(memory_space=pl.ANY),                        # word table (HBM)
                pl.BlockSpec((P, H), lambda n, ids: (0, 0)),              # pos table (resident)
                pl.BlockSpec((T, H), lambda n, ids: (0, 0)),              # type table
                pl.BlockSpec((1, H), lambda n, ids: (0, 0)),              # LN weight
                pl.BlockSpec((1, H), lambda n, ids: (0, 0)),              # LN bias
            ],
            out_specs=pl.BlockSpec((tile_s, H), lambda n, ids: (n, 0)),
            scratch_shapes=[
                pltpu.VMEM((tile_s, H), word_table.dtype),
                pltpu.SemaphoreType.DMA((1,)),
            ],
        ),
        compiler_params=pltpu.CompilerParams(
            dimension_semantics=("parallel",),
            vmem_limit_bytes=vmem_limit),
    )(ids_flat, tt_col, word_table, pos_table, type_table, ln_weight, ln_bias)

    return out_flat.reshape(B, S, H)


def reference(input_ids, token_type_ids, word_table, pos_table, type_table,
              ln_weight, ln_bias, eps=1e-12):
    B, S = input_ids.shape
    words = word_table[input_ids].astype(jnp.float32)
    pos = pos_table[jnp.arange(S)][None, :, :].astype(jnp.float32)
    types = type_table[token_type_ids].astype(jnp.float32)
    emb = words + pos + types
    u = jnp.mean(emb, axis=-1, keepdims=True)
    s = jnp.mean((emb - u) ** 2, axis=-1, keepdims=True)
    x = (emb - u) / jnp.sqrt(s + eps)
    return ln_weight[0] * x + ln_bias[0]


if __name__ == "__main__":
    # Small synthetic config consistent with the module's __init__.
    vocab_size = 64
    hidden_size = 32
    max_position_embeddings = 16
    type_vocab_size = 2
    layer_norm_eps = 1e-12
    B, S = 2, 8

    key = jax.random.PRNGKey(0)
    k_w, k_p, k_t, k_ids, k_tt = jax.random.split(key, 5)

    word_table = jax.random.normal(k_w, (vocab_size, hidden_size), jnp.float32)
    word_table = word_table.at[0].set(0.0)          # padding_idx=0 contract
    pos_table = jax.random.normal(k_p, (max_position_embeddings, hidden_size),
                                  jnp.float32)
    type_table = jax.random.normal(k_t, (type_vocab_size, hidden_size),
                                   jnp.float32)
    ln_weight = jnp.ones((1, hidden_size), jnp.float32)
    ln_bias = jnp.zeros((1, hidden_size), jnp.float32)

    input_ids = jax.random.randint(k_ids, (B, S), 0, vocab_size, jnp.int32)
    token_type_ids = jax.random.randint(k_tt, (B, S), 0, type_vocab_size,
                                        jnp.int32)

    out = bert_embeddings(input_ids, token_type_ids, word_table, pos_table,
                          type_table, ln_weight, ln_bias, eps=layer_norm_eps)
    out = jax.block_until_ready(out)

    ref = reference(input_ids, token_type_ids, word_table, pos_table,
                    type_table, ln_weight, ln_bias, eps=layer_norm_eps)
    assert out.shape == (B, S, hidden_size)
    assert jnp.allclose(out, ref, atol=1e-5, rtol=1e-5)
    print("KERNEL_OK")
</pallas_src>

<mosaic_0001>
module attributes {stable_mosaic.version = 11 : i64} {
  func.func @bert_embeddings_kernel(%arg0: i32, %arg1: memref<16xi32, #tpu.memory_space<smem>>, %arg2: memref<1x8x1xi32, #tpu.memory_space<vmem>>, %arg3: memref<64x32xf32, #tpu.memory_space<any>>, %arg4: memref<16x32xf32, #tpu.memory_space<vmem>>, %arg5: memref<2x32xf32, #tpu.memory_space<vmem>>, %arg6: memref<1x32xf32, #tpu.memory_space<vmem>>, %arg7: memref<1x32xf32, #tpu.memory_space<vmem>>, %arg8: memref<8x32xf32, #tpu.memory_space<vmem>>, %arg9: memref<8x32xf32, #tpu.memory_space<vmem>>, %arg10: memref<1x!tpu.dma_semaphore, #tpu.memory_space<semaphore_mem>>) attributes {dimension_semantics = [#tpu.dimension_semantics<parallel>], iteration_bounds = array<i64: 2>, scalar_prefetch = 1 : i64, scratch_operands = 2 : i64, tpu.core_type = #tpu.core_type<tc>, window_params = [{transform_indices = @transform_0, window_bounds = array<i64: 1, 8, 1>}, {}, {pipeline_mode = #tpu.pipeline_mode<synchronous>, transform_indices = @transform_2, window_bounds = array<i64: 16, 32>}, {pipeline_mode = #tpu.pipeline_mode<synchronous>, transform_indices = @transform_3, window_bounds = array<i64: 2, 32>}, {pipeline_mode = #tpu.pipeline_mode<synchronous>, transform_indices = @transform_4, window_bounds = array<i64: 1, 32>}, {pipeline_mode = #tpu.pipeline_mode<synchronous>, transform_indices = @transform_5, window_bounds = array<i64: 1, 32>}, {transform_indices = @transform_6, window_bounds = array<i64: 8, 32>}]} {
    %c8_i32 = arith.constant 8 : i32
    %0 = arith.muli %arg0, %c8_i32 : i32
    %c0_i32 = arith.constant 0 : i32
    %c1_i32 = arith.constant 1 : i32
    %1 = arith.muli %c0_i32, %c1_i32 : i32
    %c0_i32_0 = arith.constant 0 : i32
    %2 = arith.addi %c0_i32_0, %1 : i32
    %c8_i32_1 = arith.constant 8 : i32
    %3 = arith.muli %2, %c8_i32_1 : i32
    %4 = tpu.assume_multiple %3, 8 : i32
    %c0_i32_2 = arith.constant 0 : i32
    %5 = arith.addi %4, %c0_i32_2 : i32
    %6 = arith.addi %0, %5 : i32
    %7 = arith.index_cast %6 : i32 to index
    %8 = memref.load %arg1[%7] : memref<16xi32, #tpu.memory_space<smem>>
    %c0_i32_3 = arith.constant 0 : i32
    %c0_i32_4 = arith.constant 0 : i32
    %9 = tpu.memref_slice %arg3[%8, %c0_i32_4] : memref<64x32xf32, #tpu.memory_space<any>> -> memref<1x32xf32, #tpu.memory_space<any>>
    %c0_i32_5 = arith.constant 0 : i32
    %10 = tpu.memref_slice %arg9[%5, %c0_i32_5] : memref<8x32xf32, #tpu.memory_space<vmem>> -> memref<1x32xf32, #tpu.memory_space<vmem>>
    %11 = tpu.memref_slice %arg10[%c0_i32_3] : memref<1x!tpu.dma_semaphore, #tpu.memory_space<semaphore_mem>> -> memref<1x!tpu.dma_semaphore, #tpu.memory_space<semaphore_mem>>
    %12 = tpu.memref_squeeze %11 : memref<1x!tpu.dma_semaphore, #tpu.memory_space<semaphore_mem>> -> memref<!tpu.dma_semaphore, #tpu.memory_space<semaphore_mem>>
    tpu.enqueue_dma source(%9 : memref<1x32xf32, #tpu.memory_space<any>>) target(%10 : memref<1x32xf32, #tpu.memory_space<vmem>>) target_semaphore(%12 : memref<!tpu.dma_semaphore, #tpu.memory_space<semaphore_mem>>)
    %c1_i32_6 = arith.constant 1 : i32
    %13 = arith.addi %4, %c1_i32_6 : i32
    %14 = arith.addi %0, %13 : i32
    %15 = arith.index_cast %14 : i32 to index
    %16 = memref.load %arg1[%15] : memref<16xi32, #tpu.memory_space<smem>>
    %c0_i32_7 = arith.constant 0 : i32
    %c0_i32_8 = arith.constant 0 : i32
    %17 = tpu.memref_slice %arg3[%16, %c0_i32_8] : memref<64x32xf32, #tpu.memory_space<any>> -> memref<1x32xf32, #tpu.memory_space<any>>
    %c0_i32_9 = arith.constant 0 : i32
    %18 = tpu.memref_slice %arg9[%13, %c0_i32_9] : memref<8x32xf32, #tpu.memory_space<vmem>> -> memref<1x32xf32, #tpu.memory_space<vmem>>
    %19 = tpu.memref_slice %arg10[%c0_i32_7] : memref<1x!tpu.dma_semaphore, #tpu.memory_space<semaphore_mem>> -> memref<1x!tpu.dma_semaphore, #tpu.memory_space<semaphore_mem>>
    %20 = tpu.memref_squeeze %19 : memref<1x!tpu.dma_semaphore, #tpu.memory_space<semaphore_mem>> -> memref<!tpu.dma_semaphore, #tpu.memory_space<semaphore_mem>>
    tpu.enqueue_dma source(%17 : memref<1x32xf32, #tpu.memory_space<any>>) target(%18 : memref<1x32xf32, #tpu.memory_space<vmem>>) target_semaphore(%20 : memref<!tpu.dma_semaphore, #tpu.memory_space<semaphore_mem>>)
    %c2_i32 = arith.constant 2 : i32
    %21 = arith.addi %4, %c2_i32 : i32
    %22 = arith.addi %0, %21 : i32
    %23 = arith.index_cast %22 : i32 to index
    %24 = memref.load %arg1[%23] : memref<16xi32, #tpu.memory_space<smem>>
    %c0_i32_10 = arith.constant 0 : i32
    %c0_i32_11 = arith.constant 0 : i32
    %25 = tpu.memref_slice %arg3[%24, %c0_i32_11] : memref<64x32xf32, #tpu.memory_space<any>> -> memref<1x32xf32, #tpu.memory_space<any>>
    %c0_i32_12 = arith.constant 0 : i32
    %26 = tpu.memref_slice %arg9[%21, %c0_i32_12] : memref<8x32xf32, #tpu.memory_space<vmem>> -> memref<1x32xf32, #tpu.memory_space<vmem>>
    %27 = tpu.memref_slice %arg10[%c0_i32_10] : memref<1x!tpu.dma_semaphore, #tpu.memory_space<semaphore_mem>> -> memref<1x!tpu.dma_semaphore, #tpu.memory_space<semaphore_mem>>
    %28 = tpu.memref_squeeze %27 : memref<1x!tpu.dma_semaphore, #tpu.memory_space<semaphore_mem>> -> memref<!tpu.dma_semaphore, #tpu.memory_space<semaphore_mem>>
    tpu.enqueue_dma source(%25 : memref<1x32xf32, #tpu.memory_space<any>>) target(%26 : memref<1x32xf32, #tpu.memory_space<vmem>>) target_semaphore(%28 : memref<!tpu.dma_semaphore, #tpu.memory_space<semaphore_mem>>)
    %c3_i32 = arith.constant 3 : i32
    %29 = arith.addi %4, %c3_i32 : i32
    %30 = arith.addi %0, %29 : i32
    %31 = arith.index_cast %30 : i32 to index
    %32 = memref.load %arg1[%31] : memref<16xi32, #tpu.memory_space<smem>>
    %c0_i32_13 = arith.constant 0 : i32
    %c0_i32_14 = arith.constant 0 : i32
    %33 = tpu.memref_slice %arg3[%32, %c0_i32_14] : memref<64x32xf32, #tpu.memory_space<any>> -> memref<1x32xf32, #tpu.memory_space<any>>
    %c0_i32_15 = arith.constant 0 : i32
    %34 = tpu.memref_slice %arg9[%29, %c0_i32_15] : memref<8x32xf32, #tpu.memory_space<vmem>> -> memref<1x32xf32, #tpu.memory_space<vmem>>
    %35 = tpu.memref_slice %arg10[%c0_i32_13] : memref<1x!tpu.dma_semaphore, #tpu.memory_space<semaphore_mem>> -> memref<1x!tpu.dma_semaphore, #tpu.memory_space<semaphore_mem>>
    %36 = tpu.memref_squeeze %35 : memref<1x!tpu.dma_semaphore, #tpu.memory_space<semaphore_mem>> -> memref<!tpu.dma_semaphore, #tpu.memory_space<semaphore_mem>>
    tpu.enqueue_dma source(%33 : memref<1x32xf32, #tpu.memory_space<any>>) target(%34 : memref<1x32xf32, #tpu.memory_space<vmem>>) target_semaphore(%36 : memref<!tpu.dma_semaphore, #tpu.memory_space<semaphore_mem>>)
    %c4_i32 = arith.constant 4 : i32
    %37 = arith.addi %4, %c4_i32 : i32
    %38 = arith.addi %0, %37 : i32
    %39 = arith.index_cast %38 : i32 to index
    %40 = memref.load %arg1[%39] : memref<16xi32, #tpu.memory_space<smem>>
    %c0_i32_16 = arith.constant 0 : i32
    %c0_i32_17 = arith.constant 0 : i32
    %41 = tpu.memref_slice %arg3[%40, %c0_i32_17] : memref<64x32xf32, #tpu.memory_space<any>> -> memref<1x32xf32, #tpu.memory_space<any>>
    %c0_i32_18 = arith.constant 0 : i32
    %42 = tpu.memref_slice %arg9[%37, %c0_i32_18] : memref<8x32xf32, #tpu.memory_space<vmem>> -> memref<1x32xf32, #tpu.memory_space<vmem>>
    %43 = tpu.memref_slice %arg10[%c0_i32_16] : memref<1x!tpu.dma_semaphore, #tpu.memory_space<semaphore_mem>> -> memref<1x!tpu.dma_semaphore, #tpu.memory_space<semaphore_mem>>
    %44 = tpu.memref_squeeze %43 : memref<1x!tpu.dma_semaphore, #tpu.memory_space<semaphore_mem>> -> memref<!tpu.dma_semaphore, #tpu.memory_space<semaphore_mem>>
    tpu.enqueue_dma source(%41 : memref<1x32xf32, #tpu.memory_space<any>>) target(%42 : memref<1x32xf32, #tpu.memory_space<vmem>>) target_semaphore(%44 : memref<!tpu.dma_semaphore, #tpu.memory_space<semaphore_mem>>)
    %c5_i32 = arith.constant 5 : i32
    %45 = arith.addi %4, %c5_i32 : i32
    %46 = arith.addi %0, %45 : i32
    %47 = arith.index_cast %46 : i32 to index
    %48 = memref.load %arg1[%47] : memref<16xi32, #tpu.memory_space<smem>>
    %c0_i32_19 = arith.constant 0 : i32
    %c0_i32_20 = arith.constant 0 : i32
    %49 = tpu.memref_slice %arg3[%48, %c0_i32_20] : memref<64x32xf32, #tpu.memory_space<any>> -> memref<1x32xf32, #tpu.memory_space<any>>
    %c0_i32_21 = arith.constant 0 : i32
    %50 = tpu.memref_slice %arg9[%45, %c0_i32_21] : memref<8x32xf32, #tpu.memory_space<vmem>> -> memref<1x32xf32, #tpu.memory_space<vmem>>
    %51 = tpu.memref_slice %arg10[%c0_i32_19] : memref<1x!tpu.dma_semaphore, #tpu.memory_space<semaphore_mem>> -> memref<1x!tpu.dma_semaphore, #tpu.memory_space<semaphore_mem>>
    %52 = tpu.memref_squeeze %51 : memref<1x!tpu.dma_semaphore, #tpu.memory_space<semaphore_mem>> -> memref<!tpu.dma_semaphore, #tpu.memory_space<semaphore_mem>>
    tpu.enqueue_dma source(%49 : memref<1x32xf32, #tpu.memory_space<any>>) target(%50 : memref<1x32xf32, #tpu.memory_space<vmem>>) target_semaphore(%52 : memref<!tpu.dma_semaphore, #tpu.memory_space<semaphore_mem>>)
    %c6_i32 = arith.constant 6 : i32
    %53 = arith.addi %4, %c6_i32 : i32
    %54 = arith.addi %0, %53 : i32
    %55 = arith.index_cast %54 : i32 to index
    %56 = memref.load %arg1[%55] : memref<16xi32, #tpu.memory_space<smem>>
    %c0_i32_22 = arith.constant 0 : i32
    %c0_i32_23 = arith.constant 0 : i32
    %57 = tpu.memref_slice %arg3[%56, %c0_i32_23] : memref<64x32xf32, #tpu.memory_space<any>> -> memref<1x32xf32, #tpu.memory_space<any>>
    %c0_i32_24 = arith.constant 0 : i32
    %58 = tpu.memref_slice %arg9[%53, %c0_i32_24] : memref<8x32xf32, #tpu.memory_space<vmem>> -> memref<1x32xf32, #tpu.memory_space<vmem>>
    %59 = tpu.memref_slice %arg10[%c0_i32_22] : memref<1x!tpu.dma_semaphore, #tpu.memory_space<semaphore_mem>> -> memref<1x!tpu.dma_semaphore, #tpu.memory_space<semaphore_mem>>
    %60 = tpu.memref_squeeze %59 : memref<1x!tpu.dma_semaphore, #tpu.memory_space<semaphore_mem>> -> memref<!tpu.dma_semaphore, #tpu.memory_space<semaphore_mem>>
    tpu.enqueue_dma source(%57 : memref<1x32xf32, #tpu.memory_space<any>>) target(%58 : memref<1x32xf32, #tpu.memory_space<vmem>>) target_semaphore(%60 : memref<!tpu.dma_semaphore, #tpu.memory_space<semaphore_mem>>)
    %c7_i32 = arith.constant 7 : i32
    %61 = arith.addi %4, %c7_i32 : i32
    %62 = arith.addi %0, %61 : i32
    %63 = arith.index_cast %62 : i32 to index
    %64 = memref.load %arg1[%63] : memref<16xi32, #tpu.memory_space<smem>>
    %c0_i32_25 = arith.constant 0 : i32
    %c0_i32_26 = arith.constant 0 : i32
    %65 = tpu.memref_slice %arg3[%64, %c0_i32_26] : memref<64x32xf32, #tpu.memory_space<any>> -> memref<1x32xf32, #tpu.memory_space<any>>
    %c0_i32_27 = arith.constant 0 : i32
    %66 = tpu.memref_slice %arg9[%61, %c0_i32_27] : memref<8x32xf32, #tpu.memory_space<vmem>> -> memref<1x32xf32, #tpu.memory_space<vmem>>
    %67 = tpu.memref_slice %arg10[%c0_i32_25] : memref<1x!tpu.dma_semaphore, #tpu.memory_space<semaphore_mem>> -> memref<1x!tpu.dma_semaphore, #tpu.memory_space<semaphore_mem>>
    %68 = tpu.memref_squeeze %67 : memref<1x!tpu.dma_semaphore, #tpu.memory_space<semaphore_mem>> -> memref<!tpu.dma_semaphore, #tpu.memory_space<semaphore_mem>>
    tpu.enqueue_dma source(%65 : memref<1x32xf32, #tpu.memory_space<any>>) target(%66 : memref<1x32xf32, #tpu.memory_space<vmem>>) target_semaphore(%68 : memref<!tpu.dma_semaphore, #tpu.memory_space<semaphore_mem>>)
    %c1_i32_28 = arith.constant 1 : i32
    %c0_i32_29 = arith.constant 0 : i32
    %69 = tpu.memref_slice %arg10[%c0_i32_29] : memref<1x!tpu.dma_semaphore, #tpu.memory_space<semaphore_mem>> -> memref<1x!tpu.dma_semaphore, #tpu.memory_space<semaphore_mem>>
    %70 = tpu.memref_squeeze %69 : memref<1x!tpu.dma_semaphore, #tpu.memory_space<semaphore_mem>> -> memref<!tpu.dma_semaphore, #tpu.memory_space<semaphore_mem>>
    tpu.wait_dma2 semaphore(%70 : memref<!tpu.dma_semaphore, #tpu.memory_space<semaphore_mem>>) src(%arg9 : memref<8x32xf32, #tpu.memory_space<vmem>>) dst(%arg9 : memref<8x32xf32, #tpu.memory_space<vmem>>)
    %c0 = arith.constant 0 : index
    %c0_30 = arith.constant 0 : index
    %71 = vector.load %arg9[%c0, %c0_30] : memref<8x32xf32, #tpu.memory_space<vmem>>, vector<8x32xf32>
    %c1_i32_31 = arith.constant 1 : i32
    %c0_i32_32 = arith.constant 0 : i32
    %72 = arith.cmpi eq, %c1_i32_31, %c0_i32_32 : i32
    %c1_i32_33 = arith.constant 1 : i32
    %73 = arith.select %72, %c1_i32_33, %c1_i32_31 : i32
    %74 = arith.remsi %arg0, %73 : i32
    %c0_i32_34 = arith.constant 0 : i32
    %75 = arith.cmpi ne, %74, %c0_i32_34 : i32
    %c0_i32_35 = arith.constant 0 : i32
    %76 = arith.cmpi slt, %74, %c0_i32_35 : i32
    %c0_i32_36 = arith.constant 0 : i32
    %77 = arith.cmpi slt, %73, %c0_i32_36 : i32
    %78 = arith.xori %76, %77 : i1
    %79 = arith.andi %78, %75 : i1
    %80 = arith.addi %74, %73 : i32
    %81 = arith.select %79, %80, %74 : i32
    %c8_i32_37 = arith.constant 8 : i32
    %82 = arith.muli %81, %c8_i32_37 : i32
    %83 = tpu.assume_multiple %82, 8 : i32
    %84 = arith.index_cast %83 : i32 to index
    %c0_38 = arith.constant 0 : index
    %85 = vector.load %arg4[%84, %c0_38] : memref<16x32xf32, #tpu.memory_space<vmem>>, vector<8x32xf32>
    %c0_39 = arith.constant 0 : index
    %c0_40 = arith.constant 0 : index
    %c0_41 = arith.constant 0 : index
    %86 = vector.load %arg2[%c0_39, %c0_40, %c0_41] : memref<1x8x1xi32, #tpu.memory_space<vmem>>, vector<1x8x1xi32>
    %87 = vector.shape_cast %86 : vector<1x8x1xi32> to vector<8x1xi32>
    %c0_42 = arith.constant 0 : index
    %c0_43 = arith.constant 0 : index
    %88 = vector.load %arg5[%c0_42, %c0_43] : memref<2x32xf32, #tpu.memory_space<vmem>>, vector<1x32xf32>
    %89 = vector.shape_cast %88 : vector<1x32xf32> to vector<32xf32>
    %90 = vector.shape_cast %89 : vector<32xf32> to vector<1x32xf32>
    %91 = vector.broadcast %90 : vector<1x32xf32> to vector<8x32xf32>
    %c1_i32_44 = arith.constant 1 : i32
    %92 = vector.broadcast %c1_i32_44 : i32 to vector<8x1xi32>
    %93 = arith.cmpi eq, %87, %92 : vector<8x1xi32>
    %c1 = arith.constant 1 : index
    %c0_45 = arith.constant 0 : index
    %94 = vector.load %arg5[%c1, %c0_45] : memref<2x32xf32, #tpu.memory_space<vmem>>, vector<1x32xf32>
    %95 = vector.shape_cast %94 : vector<1x32xf32> to vector<32xf32>
    %96 = vector.shape_cast %95 : vector<32xf32> to vector<1x32xf32>
    %97 = vector.shape_cast %93 : vector<8x1xi1> to vector<8x1xi1>
    %98 = vector.broadcast %97 : vector<8x1xi1> to vector<8x32xi1>
    %99 = vector.shape_cast %96 : vector<1x32xf32> to vector<1x32xf32>
    %100 = vector.broadcast %99 : vector<1x32xf32> to vector<8x32xf32>
    %101 = arith.select %98, %100, %91 : vector<8x32xi1>, vector<8x32xf32>
    %102 = arith.addf %71, %85 : vector<8x32xf32>
    %103 = arith.addf %102, %101 : vector<8x32xf32>
    %cst = arith.constant dense<0.000000e+00> : vector<8xf32>
    %104 = vector.multi_reduction <add>, %103, %cst [1] : vector<8x32xf32> to vector<8xf32>
    %105 = vector.shape_cast %104 : vector<8xf32> to vector<8x1xf32>
    %cst_46 = arith.constant 3.200000e+01 : f32
    %106 = vector.broadcast %cst_46 : f32 to vector<8x1xf32>
    %107 = arith.divf %105, %106 : vector<8x1xf32>
    %108 = vector.broadcast %107 : vector<8x1xf32> to vector<8x32xf32>
    %109 = arith.subf %103, %108 : vector<8x32xf32>
    %110 = arith.mulf %109, %109 : vector<8x32xf32>
    %cst_47 = arith.constant dense<0.000000e+00> : vector<8xf32>
    %111 = vector.multi_reduction <add>, %110, %cst_47 [1] : vector<8x32xf32> to vector<8xf32>
    %112 = vector.shape_cast %111 : vector<8xf32> to vector<8x1xf32>
    %cst_48 = arith.constant 3.200000e+01 : f32
    %113 = vector.broadcast %cst_48 : f32 to vector<8x1xf32>
    %114 = arith.divf %112, %113 : vector<8x1xf32>
    %cst_49 = arith.constant 9.99999996E-13 : f32
    %115 = vector.broadcast %cst_49 : f32 to vector<8x1xf32>
    %116 = arith.addf %114, %115 : vector<8x1xf32>
    %117 = math.rsqrt %116 : vector<8x1xf32>
    %118 = vector.broadcast %117 : vector<8x1xf32> to vector<8x32xf32>
    %119 = arith.mulf %109, %118 : vector<8x32xf32>
    %c0_50 = arith.constant 0 : index
    %c0_51 = arith.constant 0 : index
    %120 = vector.load %arg6[%c0_50, %c0_51] : memref<1x32xf32, #tpu.memory_space<vmem>>, vector<1x32xf32>
    %121 = vector.shape_cast %120 : vector<1x32xf32> to vector<32xf32>
    %122 = vector.shape_cast %121 : vector<32xf32> to vector<1x32xf32>
    %123 = vector.broadcast %122 : vector<1x32xf32> to vector<8x32xf32>
    %124 = arith.mulf %123, %119 : vector<8x32xf32>
    %c0_52 = arith.constant 0 : index
    %c0_53 = arith.constant 0 : index
    %125 = vector.load %arg7[%c0_52, %c0_53] : memref<1x32xf32, #tpu.memory_space<vmem>>, vector<1x32xf32>
    %126 = vector.shape_cast %125 : vector<1x32xf32> to vector<32xf32>
    %127 = vector.shape_cast %126 : vector<32xf32> to vector<1x32xf32>
    %128 = vector.broadcast %127 : vector<1x32xf32> to vector<8x32xf32>
    %129 = arith.addf %124, %128 : vector<8x32xf32>
    %c0_54 = arith.constant 0 : index
    %c0_55 = arith.constant 0 : index
    %130 = vector.load %arg8[%c0_54, %c0_55] : memref<8x32xf32, #tpu.memory_space<vmem>>, vector<8x32xf32>
    tpu.vector_store %arg8[%c0_54, %c0_55], %129 {strides = array<i32>} : memref<8x32xf32, #tpu.memory_space<vmem>>, vector<8x32xf32>,
    return
  }
  func.func @transform_0(%arg0: i32, %arg1: memref<16xi32, #tpu.memory_space<smem>>) -> (i32, i32, i32) {
    %c0_i32 = arith.constant 0 : i32
    %c0_i32_0 = arith.constant 0 : i32
    %c0_i32_1 = arith.constant 0 : i32
    return %arg0, %c0_i32, %c0_i32_0 : i32, i32, i32
  }
  func.func @transform_2(%arg0: i32, %arg1: memref<16xi32, #tpu.memory_space<smem>>) -> (i32, i32) {
    %c0_i32 = arith.constant 0 : i32
    %c0_i32_0 = arith.constant 0 : i32
    %c0_i32_1 = arith.constant 0 : i32
    return %c0_i32, %c0_i32_0 : i32, i32
  }
  func.func @transform_3(%arg0: i32, %arg1: memref<16xi32, #tpu.memory_space<smem>>) -> (i32, i32) {
    %c0_i32 = arith.constant 0 : i32
    %c0_i32_0 = arith.constant 0 : i32
    %c0_i32_1 = arith.constant 0 : i32
    return %c0_i32, %c0_i32_0 : i32, i32
  }
  func.func @transform_4(%arg0: i32, %arg1: memref<16xi32, #tpu.memory_space<smem>>) -> (i32, i32) {
    %c0_i32 = arith.constant 0 : i32
    %c0_i32_0 = arith.constant 0 : i32
    %c0_i32_1 = arith.constant 0 : i32
    return %c0_i32, %c0_i32_0 : i32, i32
  }
  func.func @transform_5(%arg0: i32, %arg1: memref<16xi32, #tpu.memory_space<smem>>) -> (i32, i32) {
    %c0_i32 = arith.constant 0 : i32
    %c0_i32_0 = arith.constant 0 : i32
    %c0_i32_1 = arith.constant 0 : i32
    return %c0_i32, %c0_i32_0 : i32, i32
  }
  func.func @transform_6(%arg0: i32, %arg1: memref<16xi32, #tpu.memory_space<smem>>) -> (i32, i32) {
    %c0_i32 = arith.constant 0 : i32
    %c0_i32_0 = arith.constant 0 : i32
    return %arg0, %c0_i32 : i32, i32
  }
}

</mosaic_0001>

<llo_original>
// kernel: tpu_custom_call.1
$region0: #{tpu_custom_call.1}
  #allocation0 [shape = 'u32[]', space=smem, size = 0x4, offset = 0x4, fixed_abs, tag = 'smem constant byte address 0x4 - core index']
  #allocation1 [shape = 'u32[144,128]{1,0:T(1,128)}', space=vmem, size = 0x12000, scoped, tag = 'internal scratch']
  #allocation2 [shape = 'f32[8,32]{1,0:T(8,128)}', space=vmem, size = 0x1000, scoped, tag = 'scratch operand']
  #allocation3 [shape = 's32[1]{0}', space=sflag, size = 0x4, scoped, tag = 'scratch operand']
  #allocation4 [shape = 's32[1]{0}', space=sflag, size = 0x4, scoped, tag = 'scoped memory for tpu_custom_call.1']
  #allocation5 [shape = 'u8[512]{0}', space=smem, size = 0x200, scoped, tag = 'prefetched SMEM operand 0']
  #allocation8 [shape = 's32[]', space=sflag, size = 0x4, offset = 0, fixed_abs, tag = 'sflag constant byte address 0x0 - dummy sync flag']
  #allocation9 [shape = 's32[]', space=sflag, size = 0x4, offset = 0, fixed_abs, tag = 'sflag constant byte address 0x0 - dummy sync flag']
  #allocation10 [shape = 's32[]', space=sflag, size = 0x4, offset = 0, fixed_abs, tag = 'sflag constant byte address 0x0 - dummy sync flag']
  #allocation11 [shape = 's32[]', space=sflag, size = 0x4, offset = 0, fixed_abs, tag = 'sflag constant byte address 0x0 - dummy sync flag']
  #allocation12 [shape = 's32[]', space=sflag, size = 0x4, offset = 0, fixed_abs, tag = 'sflag constant byte address 0x0 - dummy sync flag']
  #allocation13 [shape = 's32[]', space=sflag, size = 0x4, offset = 0, fixed_abs, tag = 'sflag constant byte address 0x0 - dummy sync flag']
  #allocation14 [shape = 's32[]', space=sflag, size = 0x4, offset = 0, fixed_abs, tag = 'sflag constant byte address 0x0 - dummy sync flag']
  #allocation15 [shape = 's32[]', space=sflag, size = 0x4, offset = 0, fixed_abs, tag = 'sflag constant byte address 0x0 - dummy sync flag']
  %s0 = inlined_call_operand.vmem [shape: s32[16], index: 0, kind: input, shape index: {}]
  %s1 = inlined_call_operand.vmem [shape: s32[2,8,1], index: 1, kind: input, shape index: {}]
  %s2 = inlined_call_operand.vmem [shape: f32[64,32], index: 2, kind: input, shape index: {}]
  %s3 = inlined_call_operand.vmem [shape: f32[16,32], index: 3, kind: input, shape index: {}]
  %s4 = inlined_call_operand.vmem [shape: f32[2,32], index: 4, kind: input, shape index: {}]
  %s5 = inlined_call_operand.vmem [shape: f32[1,32], index: 5, kind: input, shape index: {}]
  %s6 = inlined_call_operand.vmem [shape: f32[1,32], index: 6, kind: input, shape index: {}]
  %s7 = inlined_call_operand.hbm [shape: f32[16,32], index: 7, kind: output, shape index: {}]
  %s8 = sld [smem:[#allocation0]]
  $region293: #{tpu_custom_call.1} parent=0
    _
  %s10 = ssub.s32 1, %s8
  %s11 = scalar_select 0, %s10, %s8
  %s12 = sshll.u32 %s0, 4
  %s13 = int_to_ptr.vmem [resolvable:$true] %s12
  %15 = dma.vmem_to_smem %s13, 16, [#allocation5], [#allocation4]
  %16 = dma.done [#allocation4], 16
  %17 = sfence
  $region1: #{tpu_custom_call.1} parent=0
    #allocation6 [shape = 'u8[8192]{0}', space=vmem, size = 0x2000, scoped, tag = 'output window, operand 0']
    #allocation7 [shape = 's32[2]{0}', space=sflag, size = 0x8, scoped, tag = 'scoped memory for tpu_custom_call.1']
    %18 = vsyncpa [#allocation7], 0
    %s19 = scalar_lea.sflag [#allocation7], 1
    %20 = vsyncpa %s19, 0
    loop: start=0, step=1, limit=4
    $region2: #{tpu_custom_call.1} parent=1 // loop_pre_header
      _
    $region3: #{tpu_custom_call.1} parent=1 // loop_header
      %s22 = sphi 0, %s26
      %p23 = scmp.ge.s32.totalorder %s22, 4
      %s32 = sphi 0, %s34
      %s35 = sphi 0, %s32
      %s36 = sphi 0, %s35
      %s52 = sphi 0, %s36
      %s56 = sphi 0, %s56
      %s58 = sphi 0, %s56
      %s59 = sphi 0, %s58
      %s73 = sphi 0, %s59
      %s77 = sphi 0, %s77
      %s79 = sphi 0, %s77
      %s80 = sphi 0, %s79
      %s94 = sphi 0, %s80
      %s98 = sphi 0, %s98
      %s100 = sphi 0, %s98
      %s101 = sphi 0, %s100
      %s115 = sphi 0, %s101
      %s119 = sphi 0, %s119
      %s121 = sphi 0, %s119
      %s122 = sphi 0, %s121
      %s136 = sphi 0, %s122
      %s142 = sphi 0, %s144
      %s145 = sphi 0, %s142
      %s146 = sphi 0, %s145
      %s162 = sphi 0, %s146
    $region4: #{tpu_custom_call.1} parent=1 // loop_header_branch
      %25 = sbr.rel (%p23) target = $region8
    $region5: #{tpu_custom_call.1} parent=1 // loop_body
      %s27 = ssub.s32 %s22, 1
      %s28 = ssub.s32 %s22, 2
      %s29 = sadd.s32 %s22, 1
      %s30 = ssub.s32 %s22, %s29
      %p31 = scmp.eq.s32.totalorder %s30, 0
      %s33 = sadd.s32 %s32, 1
      %s34 = scalar_select %p31, %s32, %s33
      %p37 = pneg %p31
      %p38 = scmp.eq.s32.totalorder %s22, 1
      %p39 = por %p37, %p38
      %p40 = scmp.ne.s32.totalorder %s32, %s35
      %p41 = scmp.eq.s32.totalorder %s22, 0
      %p42 = por %p40, %p41
      %p43 = scmp.ne.s32.totalorder %s32, %s35
      %p44 = scmp.eq.s32.totalorder %s27, 1
      %p45 = por %p43, %p44
      %p46 = scmp.ne.s32.totalorder %s35, %s36
      %p47 = scmp.eq.s32.totalorder %s27, 0
      %p48 = por %p46, %p47
      %p49 = scmp.ne.s32.totalorder %s35, %s36
      %p50 = scmp.eq.s32.totalorder %s28, 1
      %p51 = por %p49, %p50
      %p53 = scmp.ne.s32.totalorder %s36, %s52
      %p54 = scmp.eq.s32.totalorder %s28, 0
      %p55 = por %p53, %p54
      %s57 = sadd.s32 %s56, 1
      %p60 = scmp.eq.s32.totalorder %s22, 1
      %p61 = scmp.ne.s32.totalorder %s56, %s58
      %p62 = scmp.eq.s32.totalorder %s22, 0
      %p63 = por %p61, %p62
      %p64 = scmp.ne.s32.totalorder %s56, %s58
      %p65 = scmp.eq.s32.totalorder %s27, 1
      %p66 = por %p64, %p65
      %p67 = scmp.ne.s32.totalorder %s58, %s59
      %p68 = scmp.eq.s32.totalorder %s27, 0
      %p69 = por %p67, %p68
      %p70 = scmp.ne.s32.totalorder %s58, %s59
      %p71 = scmp.eq.s32.totalorder %s28, 1
      %p72 = por %p70, %p71
      %p74 = scmp.ne.s32.totalorder %s59, %s73
      %p75 = scmp.eq.s32.totalorder %s28, 0
      %p76 = por %p74, %p75
      %s78 = sadd.s32 %s77, 1
      %p81 = scmp.eq.s32.totalorder %s22, 1
      %p82 = scmp.ne.s32.totalorder %s77, %s79
      %p83 = scmp.eq.s32.totalorder %s22, 0
      %p84 = por %p82, %p83
      %p85 = scmp.ne.s32.totalorder %s77, %s79
      %p86 = scmp.eq.s32.totalorder %s27, 1
      %p87 = por %p85, %p86
      %p88 = scmp.ne.s32.totalorder %s79, %s80
      %p89 = scmp.eq.s32.totalorder %s27, 0
      %p90 = por %p88, %p89
      %p91 = scmp.ne.s32.totalorder %s79, %s80
      %p92 = scmp.eq.s32.totalorder %s28, 1
      %p93 = por %p91, %p92
      %p95 = scmp.ne.s32.totalorder %s80, %s94
      %p96 = scmp.eq.s32.totalorder %s28, 0
      %p97 = por %p95, %p96
      %s99 = sadd.s32 %s98, 1
      %p102 = scmp.eq.s32.totalorder %s22, 1
      %p103 = scmp.ne.s32.totalorder %s98, %s100
      %p104 = scmp.eq.s32.totalorder %s22, 0
      %p105 = por %p103, %p104
      %p106 = scmp.ne.s32.totalorder %s98, %s100
      %p107 = scmp.eq.s32.totalorder %s27, 1
      %p108 = por %p106, %p107
      %p109 = scmp.ne.s32.totalorder %s100, %s101
      %p110 = scmp.eq.s32.totalorder %s27, 0
      %p111 = por %p109, %p110
      %p112 = scmp.ne.s32.totalorder %s100, %s101
      %p113 = scmp.eq.s32.totalorder %s28, 1
      %p114 = por %p112, %p113
      %p116 = scmp.ne.s32.totalorder %s101, %s115
      %p117 = scmp.eq.s32.totalorder %s28, 0
      %p118 = por %p116, %p117
      %s120 = sadd.s32 %s119, 1
      %p123 = scmp.eq.s32.totalorder %s22, 1
      %p124 = scmp.ne.s32.totalorder %s119, %s121
      %p125 = scmp.eq.s32.totalorder %s22, 0
      %p126 = por %p124, %p125
      %p127 = scmp.ne.s32.totalorder %s119, %s121
      %p128 = scmp.eq.s32.totalorder %s27, 1
      %p129 = por %p127, %p128
      %p130 = scmp.ne.s32.totalorder %s121, %s122
      %p131 = scmp.eq.s32.totalorder %s27, 0
      %p132 = por %p130, %p131
      %p133 = scmp.ne.s32.totalorder %s121, %s122
      %p134 = scmp.eq.s32.totalorder %s28, 1
      %p135 = por %p133, %p134
      %p137 = scmp.ne.s32.totalorder %s122, %s136
      %p138 = scmp.eq.s32.totalorder %s28, 0
      %p139 = por %p137, %p138
      %s140 = ssub.s32 %s22, %s29
      %p141 = scmp.eq.s32.totalorder %s140, 0
      %s143 = sadd.s32 %s142, 1
      %s144 = scalar_select %p141, %s142, %s143
      %p147 = pneg %p141
      %p148 = scmp.eq.s32.totalorder %s22, 1
      %p149 = por %p147, %p148
      %p150 = scmp.ne.s32.totalorder %s142, %s145
      %p151 = scmp.eq.s32.totalorder %s22, 0
      %p152 = por %p150, %p151
      %p153 = scmp.ne.s32.totalorder %s142, %s145
      %p154 = scmp.eq.s32.totalorder %s27, 1
      %p155 = por %p153, %p154
      %p156 = scmp.ne.s32.totalorder %s145, %s146
      %p157 = scmp.eq.s32.totalorder %s27, 0
      %p158 = por %p156, %p157
      %p159 = scmp.ne.s32.totalorder %s145, %s146
      %p160 = scmp.eq.s32.totalorder %s28, 1
      %p161 = por %p159, %p160
      %p163 = scmp.ne.s32.totalorder %s146, %s162
      %p164 = scmp.eq.s32.totalorder %s28, 0
      %p165 = por %p163, %p164
      %p166 = scmp.le.s32.totalorder 1, %s22
      %p167 = scmp.lt.s32.totalorder %s22, 3
      %p168 = pnand %p166, %p167
      %p169 = pneg %p168
      // Predicated region
      $region9: #{tpu_custom_call.1} parent=5 // pred_check
        _
      $region10: #{tpu_custom_call.1} parent=5 // pred_check_branch
        %171 = sbr.rel (%p168) target = $region12
      $region11: #{tpu_custom_call.1} parent=5 // pred_region
        %s172 = ssub.s32 %s22, 1
        // Predicated region
        $region13: #{tpu_custom_call.1} parent=11 // pred_check
          %p173 = pneg %p69
        $region14: #{tpu_custom_call.1} parent=11 // pred_check_branch
          %175 = sbr.rel (%p173) target = $region16
        $region15: #{tpu_custom_call.1} parent=11 // pred_region
          _
        $region16: #{tpu_custom_call.1} parent=11 // pred_fallthru
          _
        // Predicated region
        $region17: #{tpu_custom_call.1} parent=11 // pred_check
          %p176 = pneg %p90
        $region18: #{tpu_custom_call.1} parent=11 // pred_check_branch
          %178 = sbr.rel (%p176) target = $region20
        $region19: #{tpu_custom_call.1} parent=11 // pred_region
          _
        $region20: #{tpu_custom_call.1} parent=11 // pred_fallthru
          _
        // Predicated region
        $region21: #{tpu_custom_call.1} parent=11 // pred_check
          %p179 = pneg %p111
        $region22: #{tpu_custom_call.1} parent=11 // pred_check_branch
          %181 = sbr.rel (%p179) target = $region24
        $region23: #{tpu_custom_call.1} parent=11 // pred_region
          _
        $region24: #{tpu_custom_call.1} parent=11 // pred_fallthru
          _
        // Predicated region
        $region25: #{tpu_custom_call.1} parent=11 // pred_check
          %p182 = pneg %p132
        $region26: #{tpu_custom_call.1} parent=11 // pred_check_branch
          %184 = sbr.rel (%p182) target = $region28
        $region27: #{tpu_custom_call.1} parent=11 // pred_region
          _
        $region28: #{tpu_custom_call.1} parent=11 // pred_fallthru
          _
      $region12: #{tpu_custom_call.1} parent=5 // pred_fallthru
        _
      %p185 = scmp.lt.s32.totalorder %s22, 2
      // Predicated region
      $region29: #{tpu_custom_call.1} parent=5 // pred_check
        %p186 = pneg %p185
      $region30: #{tpu_custom_call.1} parent=5 // pred_check_branch
        %188 = sbr.rel (%p186) target = $region32
      $region31: #{tpu_custom_call.1} parent=5 // pred_region
        // Predicated region
        $region33: #{tpu_custom_call.1} parent=31 // pred_check
          %p189 = pneg %p42
        $region34: #{tpu_custom_call.1} parent=31 // pred_check_branch
          %191 = sbr.rel (%p189) target = $region36
        $region35: #{tpu_custom_call.1} parent=31 // pred_region
          %p192 = scmp.lt.s32.totalorder %s22, 1
          %s193 = scalar_select %p192, %s22, 1
          %s194 = smul.addr %s193, 8
          %s195 = scalar_lea.vmem %s1, %s194
        $region36: #{tpu_custom_call.1} parent=31 // pred_fallthru
          _
      $region32: #{tpu_custom_call.1} parent=5 // pred_fallthru
        _
      %p196 = scmp.le.s32.totalorder 1, %s22
      %p197 = scmp.lt.s32.totalorder %s22, 3
      %p198 = pnand %p196, %p197
      %p199 = pneg %p198
      // Predicated region
      $region37: #{tpu_custom_call.1} parent=5 // pred_check
        _
      $region38: #{tpu_custom_call.1} parent=5 // pred_check_branch
        %201 = sbr.rel (%p198) target = $region40
      $region39: #{tpu_custom_call.1} parent=5 // pred_region
        %s202 = ssub.s32 %s22, 1
        %p203 = scmp.lt.s32.totalorder %s27, 1
        %s204 = scalar_select %p203, %s27, 1
        %s205 = smul.addr %s204, 8
        %s206 = scalar_lea.vmem %s1, %s205
        %p207 = pneg %p48
        %p208 = pneg %p45
        %p209 = pneg %p69
        %p210 = pneg %p66
        %p211 = pneg %p90
        %p212 = pneg %p87
        %p213 = pneg %p111
        %p214 = pneg %p108
        %p215 = pneg %p132
        %p216 = pneg %p129
        %p217 = pneg %p158
        %p218 = pneg %p155
        %s219 = sand.u32 %s145, 1
        %s220 = scalar_lea.sflag [#allocation7], %s219
        %s221 = sand.u32 %s145, 1
        %s222 = smul.addr %s221, 8
        %s223 = scalar_lea.vmem [#allocation6], %s222
        %p224 = scmp.lt.s32.totalorder %s27, 1
        %s225 = scalar_select %p224, %s27, 1
        %s226 = smul.addr %s225, 8
        %s227 = scalar_lea.vmem %s1, %s226
        %s228 = smul.u32 %s27, 8
        %s229 = sadd.s32 %s228, 0
        %s230 = sld [smem:[#allocation5 + %s229]]
        %s231 = scalar_lea.vmem %s2, %s230
        %p233 = scmp.lt.u32.totalorder 1, 8
        %p234 = pneg %p233
        // Predicated region
        $region41: #{tpu_custom_call.1} parent=39 // pred_check
          _
        $region42: #{tpu_custom_call.1} parent=39 // pred_check_branch
          %236 = sbr.rel (%p233) target = $region44
        $region43: #{tpu_custom_call.1} parent=39 // pred_region
          %s251 = sand.u32 1, 7
          %p252 = scmp.eq.s32.totalorder %s251, 0
          %p253 = pneg %p252
          // Predicated region
          $region56: #{tpu_custom_call.1} parent=43 // pred_check
            _
          $region57: #{tpu_custom_call.1} parent=43 // pred_check_branch
            %255 = sbr.rel (%p252) target = $region59
          $region58: #{tpu_custom_call.1} parent=43 // pred_region
            %s256 = sand.u32 1, 7
            %s257 = ssub.s32 1, %s256
            %s258 = scalar_lea.vmem %s231, %s257
            %s259 = ssub.s32 1, %s256
            %s260 = scalar_lea.vmem [#allocation2], %s259
            %s261 = sshllo.u32 0, %s256
            loop: start=0, step=1, limit=1
            $region60: #{tpu_custom_call.1} parent=58 // loop_pre_header
              _
            $region61: #{tpu_custom_call.1} parent=58 // loop_header
              %s263 = sphi 0, %s267
              %p264 = scmp.ge.s32.totalorder %s263, 1
              %s268 = sphi %s258, %s258
              %s269 = sphi %s260, %s260
            $region62: #{tpu_custom_call.1} parent=58 // loop_header_branch
              %266 = sbr.rel (%p264) target = $region66
            $region63: #{tpu_custom_call.1} parent=58 // loop_body
              %v270 = vld [vmem:[%s268] sm:%s261]
              %271 = vst [vmem:[%s269] sm:%s261] %v270
            $region64: #{tpu_custom_call.1} parent=58 // loop_footer
              %s267 = sadd.s32 1, %s263
            $region65: #{tpu_custom_call.1} parent=58 // loop_footer_branch
              %262 = sbr.rel target = $region61
            $region66: #{tpu_custom_call.1} parent=58 // loop_exit
              _
          $region59: #{tpu_custom_call.1} parent=43 // pred_fallthru
            _
        $region44: #{tpu_custom_call.1} parent=39 // pred_fallthru
          _
        // Predicated region
        $region45: #{tpu_custom_call.1} parent=39 // pred_check
          %p237 = pneg %p233
        $region46: #{tpu_custom_call.1} parent=39 // pred_check_branch
          %239 = sbr.rel (%p237) target = $region48
        $region47: #{tpu_custom_call.1} parent=39 // pred_region
          %s240 = sshllo.u32 0, 1
          loop: start=0, step=1, limit=1
          $region49: #{tpu_custom_call.1} parent=47 // loop_pre_header
            _
          $region50: #{tpu_custom_call.1} parent=47 // loop_header
            %s242 = sphi 0, %s246
            %p243 = scmp.ge.s32.totalorder %s242, 1
            %s247 = sphi %s231, %s231
            %s248 = sphi [#allocation2], [#allocation2]
          $region51: #{tpu_custom_call.1} parent=47 // loop_header_branch
            %245 = sbr.rel (%p243) target = $region55
          $region52: #{tpu_custom_call.1} parent=47 // loop_body
            %v249 = vld [vmem:[%s247] sm:%s240]
            %250 = vst [vmem:[%s248] sm:%s240] %v249
          $region53: #{tpu_custom_call.1} parent=47 // loop_footer
            %s246 = sadd.s32 1, %s242
          $region54: #{tpu_custom_call.1} parent=47 // loop_footer_branch
            %241 = sbr.rel target = $region50
          $region55: #{tpu_custom_call.1} parent=47 // loop_exit
            _
        $region48: #{tpu_custom_call.1} parent=39 // pred_fallthru
          _
        // Predicated region
        $region67: #{tpu_custom_call.1} parent=39 // pred_check
          _
        $region68: #{tpu_custom_call.1} parent=39 // pred_check_branch
          %274 = sbr.rel (0) target = $region70
        $region69: #{tpu_custom_call.1} parent=39 // pred_region
          %275 = vsyncadd [#allocation3], 16
        $region70: #{tpu_custom_call.1} parent=39 // pred_fallthru
          _
        %s276 = sadd.s32 0, 1
        %s277 = sadd.s32 %s228, %s276
        %s278 = sld [smem:[#allocation5 + %s277]]
        %s279 = scalar_lea.vmem %s2, %s278
        %s280 = scalar_lea.vmem [#allocation2], %s276
        %p282 = scmp.lt.u32.totalorder 1, 8
        %p283 = pneg %p282
        // Predicated region
        $region71: #{tpu_custom_call.1} parent=39 // pred_check
          _
        $region72: #{tpu_custom_call.1} parent=39 // pred_check_branch
          %285 = sbr.rel (%p282) target = $region74
        $region73: #{tpu_custom_call.1} parent=39 // pred_region
          %s300 = sand.u32 1, 7
          %p301 = scmp.eq.s32.totalorder %s300, 0
          %p302 = pneg %p301
          // Predicated region
          $region86: #{tpu_custom_call.1} parent=73 // pred_check
            _
          $region87: #{tpu_custom_call.1} parent=73 // pred_check_branch
            %304 = sbr.rel (%p301) target = $region89
          $region88: #{tpu_custom_call.1} parent=73 // pred_region
            %s305 = sand.u32 1, 7
            %s306 = ssub.s32 1, %s305
            %s307 = scalar_lea.vmem %s279, %s306
            %s308 = ssub.s32 1, %s305
            %s309 = scalar_lea.vmem %s280, %s308 [#allocation2]
            %s310 = sshllo.u32 0, %s305
            loop: start=0, step=1, limit=1
            $region90: #{tpu_custom_call.1} parent=88 // loop_pre_header
              _
            $region91: #{tpu_custom_call.1} parent=88 // loop_header
              %s312 = sphi 0, %s316
              %p313 = scmp.ge.s32.totalorder %s312, 1
              %s317 = sphi %s307, %s307
              %s318 = sphi %s309, %s309
            $region92: #{tpu_custom_call.1} parent=88 // loop_header_branch
              %315 = sbr.rel (%p313) target = $region96
            $region93: #{tpu_custom_call.1} parent=88 // loop_body
              %v319 = vld [vmem:[%s317] sm:%s310]
              %320 = vst [vmem:[%s318] sm:%s310] %v319
            $region94: #{tpu_custom_call.1} parent=88 // loop_footer
              %s316 = sadd.s32 1, %s312
            $region95: #{tpu_custom_call.1} parent=88 // loop_footer_branch
              %311 = sbr.rel target = $region91
            $region96: #{tpu_custom_call.1} parent=88 // loop_exit
              _
          $region89: #{tpu_custom_call.1} parent=73 // pred_fallthru
            _
        $region74: #{tpu_custom_call.1} parent=39 // pred_fallthru
          _
        // Predicated region
        $region75: #{tpu_custom_call.1} parent=39 // pred_check
          %p286 = pneg %p282
        $region76: #{tpu_custom_call.1} parent=39 // pred_check_branch
          %288 = sbr.rel (%p286) target = $region78
        $region77: #{tpu_custom_call.1} parent=39 // pred_region
          %s289 = sshllo.u32 0, 1
          loop: start=0, step=1, limit=1
          $region79: #{tpu_custom_call.1} parent=77 // loop_pre_header
            _
          $region80: #{tpu_custom_call.1} parent=77 // loop_header
            %s291 = sphi 0, %s295
            %p292 = scmp.ge.s32.totalorder %s291, 1
            %s296 = sphi %s279, %s279
            %s297 = sphi %s280, %s280
          $region81: #{tpu_custom_call.1} parent=77 // loop_header_branch
            %294 = sbr.rel (%p292) target = $region85
          $region82: #{tpu_custom_call.1} parent=77 // loop_body
            %v298 = vld [vmem:[%s296] sm:%s289]
            %299 = vst [vmem:[%s297] sm:%s289] %v298
          $region83: #{tpu_custom_call.1} parent=77 // loop_footer
            %s295 = sadd.s32 1, %s291
          $region84: #{tpu_custom_call.1} parent=77 // loop_footer_branch
            %290 = sbr.rel target = $region80
          $region85: #{tpu_custom_call.1} parent=77 // loop_exit
            _
        $region78: #{tpu_custom_call.1} parent=39 // pred_fallthru
          _
        // Predicated region
        $region97: #{tpu_custom_call.1} parent=39 // pred_check
          _
        $region98: #{tpu_custom_call.1} parent=39 // pred_check_branch
          %323 = sbr.rel (0) target = $region100
        $region99: #{tpu_custom_call.1} parent=39 // pred_region
          %324 = vsyncadd [#allocation3], 16
        $region100: #{tpu_custom_call.1} parent=39 // pred_fallthru
          _
        %s325 = sadd.s32 0, 2
        %s326 = sadd.s32 %s228, %s325
        %s327 = sld [smem:[#allocation5 + %s326]]
        %s328 = scalar_lea.vmem %s2, %s327
        %s329 = scalar_lea.vmem [#allocation2], %s325
        %p331 = scmp.lt.u32.totalorder 1, 8
        %p332 = pneg %p331
        // Predicated region
        $region101: #{tpu_custom_call.1} parent=39 // pred_check
          _
        $region102: #{tpu_custom_call.1} parent=39 // pred_check_branch
          %334 = sbr.rel (%p331) target = $region104
        $region103: #{tpu_custom_call.1} parent=39 // pred_region
          %s349 = sand.u32 1, 7
          %p350 = scmp.eq.s32.totalorder %s349, 0
          %p351 = pneg %p350
          // Predicated region
          $region116: #{tpu_custom_call.1} parent=103 // pred_check
            _
          $region117: #{tpu_custom_call.1} parent=103 // pred_check_branch
            %353 = sbr.rel (%p350) target = $region119
          $region118: #{tpu_custom_call.1} parent=103 // pred_region
            %s354 = sand.u32 1, 7
            %s355 = ssub.s32 1, %s354
            %s356 = scalar_lea.vmem %s328, %s355
            %s357 = ssub.s32 1, %s354
            %s358 = scalar_lea.vmem %s329, %s357 [#allocation2]
            %s359 = sshllo.u32 0, %s354
            loop: start=0, step=1, limit=1
            $region120: #{tpu_custom_call.1} parent=118 // loop_pre_header
              _
            $region121: #{tpu_custom_call.1} parent=118 // loop_header
              %s361 = sphi 0, %s365
              %p362 = scmp.ge.s32.totalorder %s361, 1
              %s366 = sphi %s356, %s356
              %s367 = sphi %s358, %s358
            $region122: #{tpu_custom_call.1} parent=118 // loop_header_branch
              %364 = sbr.rel (%p362) target = $region126
            $region123: #{tpu_custom_call.1} parent=118 // loop_body
              %v368 = vld [vmem:[%s366] sm:%s359]
              %369 = vst [vmem:[%s367] sm:%s359] %v368
            $region124: #{tpu_custom_call.1} parent=118 // loop_footer
              %s365 = sadd.s32 1, %s361
            $region125: #{tpu_custom_call.1} parent=118 // loop_footer_branch
              %360 = sbr.rel target = $region121
            $region126: #{tpu_custom_call.1} parent=118 // loop_exit
              _
          $region119: #{tpu_custom_call.1} parent=103 // pred_fallthru
            _
        $region104: #{tpu_custom_call.1} parent=39 // pred_fallthru
          _
        // Predicated region
        $region105: #{tpu_custom_call.1} parent=39 // pred_check
          %p335 = pneg %p331
        $region106: #{tpu_custom_call.1} parent=39 // pred_check_branch
          %337 = sbr.rel (%p335) target = $region108
        $region107: #{tpu_custom_call.1} parent=39 // pred_region
          %s338 = sshllo.u32 0, 1
          loop: start=0, step=1, limit=1
          $region109: #{tpu_custom_call.1} parent=107 // loop_pre_header
            _
          $region110: #{tpu_custom_call.1} parent=107 // loop_header
            %s340 = sphi 0, %s344
            %p341 = scmp.ge.s32.totalorder %s340, 1
            %s345 = sphi %s328, %s328
            %s346 = sphi %s329, %s329
          $region111: #{tpu_custom_call.1} parent=107 // loop_header_branch
            %343 = sbr.rel (%p341) target = $region115
          $region112: #{tpu_custom_call.1} parent=107 // loop_body
            %v347 = vld [vmem:[%s345] sm:%s338]
            %348 = vst [vmem:[%s346] sm:%s338] %v347
          $region113: #{tpu_custom_call.1} parent=107 // loop_footer
            %s344 = sadd.s32 1, %s340
          $region114: #{tpu_custom_call.1} parent=107 // loop_footer_branch
            %339 = sbr.rel target = $region110
          $region115: #{tpu_custom_call.1} parent=107 // loop_exit
            _
        $region108: #{tpu_custom_call.1} parent=39 // pred_fallthru
          _
        // Predicated region
        $region127: #{tpu_custom_call.1} parent=39 // pred_check
          _
        $region128: #{tpu_custom_call.1} parent=39 // pred_check_branch
          %372 = sbr.rel (0) target = $region130
        $region129: #{tpu_custom_call.1} parent=39 // pred_region
          %373 = vsyncadd [#allocation3], 16
        $region130: #{tpu_custom_call.1} parent=39 // pred_fallthru
          _
        %s374 = sadd.s32 0, 3
        %s375 = sadd.s32 %s228, %s374
        %s376 = sld [smem:[#allocation5 + %s375]]
        %s377 = scalar_lea.vmem %s2, %s376
        %s378 = scalar_lea.vmem [#allocation2], %s374
        %p380 = scmp.lt.u32.totalorder 1, 8
        %p381 = pneg %p380
        // Predicated region
        $region131: #{tpu_custom_call.1} parent=39 // pred_check
          _
        $region132: #{tpu_custom_call.1} parent=39 // pred_check_branch
          %383 = sbr.rel (%p380) target = $region134
        $region133: #{tpu_custom_call.1} parent=39 // pred_region
          %s398 = sand.u32 1, 7
          %p399 = scmp.eq.s32.totalorder %s398, 0
          %p400 = pneg %p399
          // Predicated region
          $region146: #{tpu_custom_call.1} parent=133 // pred_check
            _
          $region147: #{tpu_custom_call.1} parent=133 // pred_check_branch
            %402 = sbr.rel (%p399) target = $region149
          $region148: #{tpu_custom_call.1} parent=133 // pred_region
            %s403 = sand.u32 1, 7
            %s404 = ssub.s32 1, %s403
            %s405 = scalar_lea.vmem %s377, %s404
            %s406 = ssub.s32 1, %s403
            %s407 = scalar_lea.vmem %s378, %s406 [#allocation2]
            %s408 = sshllo.u32 0, %s403
            loop: start=0, step=1, limit=1
            $region150: #{tpu_custom_call.1} parent=148 // loop_pre_header
              _
            $region151: #{tpu_custom_call.1} parent=148 // loop_header
              %s410 = sphi 0, %s414
              %p411 = scmp.ge.s32.totalorder %s410, 1
              %s415 = sphi %s405, %s405
              %s416 = sphi %s407, %s407
            $region152: #{tpu_custom_call.1} parent=148 // loop_header_branch
              %413 = sbr.rel (%p411) target = $region156
            $region153: #{tpu_custom_call.1} parent=148 // loop_body
              %v417 = vld [vmem:[%s415] sm:%s408]
              %418 = vst [vmem:[%s416] sm:%s408] %v417
            $region154: #{tpu_custom_call.1} parent=148 // loop_footer
              %s414 = sadd.s32 1, %s410
            $region155: #{tpu_custom_call.1} parent=148 // loop_footer_branch
              %409 = sbr.rel target = $region151
            $region156: #{tpu_custom_call.1} parent=148 // loop_exit
              _
          $region149: #{tpu_custom_call.1} parent=133 // pred_fallthru
            _
        $region134: #{tpu_custom_call.1} parent=39 // pred_fallthru
          _
        // Predicated region
        $region135: #{tpu_custom_call.1} parent=39 // pred_check
          %p384 = pneg %p380
        $region136: #{tpu_custom_call.1} parent=39 // pred_check_branch
          %386 = sbr.rel (%p384) target = $region138
        $region137: #{tpu_custom_call.1} parent=39 // pred_region
          %s387 = sshllo.u32 0, 1
          loop: start=0, step=1, limit=1
          $region139: #{tpu_custom_call.1} parent=137 // loop_pre_header
            _
          $region140: #{tpu_custom_call.1} parent=137 // loop_header
            %s389 = sphi 0, %s393
            %p390 = scmp.ge.s32.totalorder %s389, 1
            %s394 = sphi %s377, %s377
            %s395 = sphi %s378, %s378
          $region141: #{tpu_custom_call.1} parent=137 // loop_header_branch
            %392 = sbr.rel (%p390) target = $region145
          $region142: #{tpu_custom_call.1} parent=137 // loop_body
            %v396 = vld [vmem:[%s394] sm:%s387]
            %397 = vst [vmem:[%s395] sm:%s387] %v396
          $region143: #{tpu_custom_call.1} parent=137 // loop_footer
            %s393 = sadd.s32 1, %s389
          $region144: #{tpu_custom_call.1} parent=137 // loop_footer_branch
            %388 = sbr.rel target = $region140
          $region145: #{tpu_custom_call.1} parent=137 // loop_exit
            _
        $region138: #{tpu_custom_call.1} parent=39 // pred_fallthru
          _
        // Predicated region
        $region157: #{tpu_custom_call.1} parent=39 // pred_check
          _
        $region158: #{tpu_custom_call.1} parent=39 // pred_check_branch
          %421 = sbr.rel (0) target = $region160
        $region159: #{tpu_custom_call.1} parent=39 // pred_region
          %422 = vsyncadd [#allocation3], 16
        $region160: #{tpu_custom_call.1} parent=39 // pred_fallthru
          _
        %s423 = sadd.s32 0, 4
        %s424 = sadd.s32 %s228, %s423
        %s425 = sld [smem:[#allocation5 + %s424]]
        %s426 = scalar_lea.vmem %s2, %s425
        %s427 = scalar_lea.vmem [#allocation2], %s423
        %p429 = scmp.lt.u32.totalorder 1, 8
        %p430 = pneg %p429
        // Predicated region
        $region161: #{tpu_custom_call.1} parent=39 // pred_check
          _
        $region162: #{tpu_custom_call.1} parent=39 // pred_check_branch
          %432 = sbr.rel (%p429) target = $region164
        $region163: #{tpu_custom_call.1} parent=39 // pred_region
          %s447 = sand.u32 1, 7
          %p448 = scmp.eq.s32.totalorder %s447, 0
          %p449 = pneg %p448
          // Predicated region
          $region176: #{tpu_custom_call.1} parent=163 // pred_check
            _
          $region177: #{tpu_custom_call.1} parent=163 // pred_check_branch
            %451 = sbr.rel (%p448) target = $region179
          $region178: #{tpu_custom_call.1} parent=163 // pred_region
            %s452 = sand.u32 1, 7
            %s453 = ssub.s32 1, %s452
            %s454 = scalar_lea.vmem %s426, %s453
            %s455 = ssub.s32 1, %s452
            %s456 = scalar_lea.vmem %s427, %s455 [#allocation2]
            %s457 = sshllo.u32 0, %s452
            loop: start=0, step=1, limit=1
            $region180: #{tpu_custom_call.1} parent=178 // loop_pre_header
              _
            $region181: #{tpu_custom_call.1} parent=178 // loop_header
              %s459 = sphi 0, %s463
              %p460 = scmp.ge.s32.totalorder %s459, 1
              %s464 = sphi %s454, %s454
              %s465 = sphi %s456, %s456
            $region182: #{tpu_custom_call.1} parent=178 // loop_header_branch
              %462 = sbr.rel (%p460) target = $region186
            $region183: #{tpu_custom_call.1} parent=178 // loop_body
              %v466 = vld [vmem:[%s464] sm:%s457]
              %467 = vst [vmem:[%s465] sm:%s457] %v466
            $region184: #{tpu_custom_call.1} parent=178 // loop_footer
              %s463 = sadd.s32 1, %s459
            $region185: #{tpu_custom_call.1} parent=178 // loop_footer_branch
              %458 = sbr.rel target = $region181
            $region186: #{tpu_custom_call.1} parent=178 // loop_exit
              _
          $region179: #{tpu_custom_call.1} parent=163 // pred_fallthru
            _
        $region164: #{tpu_custom_call.1} parent=39 // pred_fallthru
          _
        // Predicated region
        $region165: #{tpu_custom_call.1} parent=39 // pred_check
          %p433 = pneg %p429
        $region166: #{tpu_custom_call.1} parent=39 // pred_check_branch
          %435 = sbr.rel (%p433) target = $region168
        $region167: #{tpu_custom_call.1} parent=39 // pred_region
          %s436 = sshllo.u32 0, 1
          loop: start=0, step=1, limit=1
          $region169: #{tpu_custom_call.1} parent=167 // loop_pre_header
            _
          $region170: #{tpu_custom_call.1} parent=167 // loop_header
            %s438 = sphi 0, %s442
            %p439 = scmp.ge.s32.totalorder %s438, 1
            %s443 = sphi %s426, %s426
            %s444 = sphi %s427, %s427
          $region171: #{tpu_custom_call.1} parent=167 // loop_header_branch
            %441 = sbr.rel (%p439) target = $region175
          $region172: #{tpu_custom_call.1} parent=167 // loop_body
            %v445 = vld [vmem:[%s443] sm:%s436]
            %446 = vst [vmem:[%s444] sm:%s436] %v445
          $region173: #{tpu_custom_call.1} parent=167 // loop_footer
            %s442 = sadd.s32 1, %s438
          $region174: #{tpu_custom_call.1} parent=167 // loop_footer_branch
            %437 = sbr.rel target = $region170
          $region175: #{tpu_custom_call.1} parent=167 // loop_exit
            _
        $region168: #{tpu_custom_call.1} parent=39 // pred_fallthru
          _
        // Predicated region
        $region187: #{tpu_custom_call.1} parent=39 // pred_check
          _
        $region188: #{tpu_custom_call.1} parent=39 // pred_check_branch
          %470 = sbr.rel (0) target = $region190
        $region189: #{tpu_custom_call.1} parent=39 // pred_region
          %471 = vsyncadd [#allocation3], 16
        $region190: #{tpu_custom_call.1} parent=39 // pred_fallthru
          _
        %s472 = sadd.s32 0, 5
        %s473 = sadd.s32 %s228, %s472
        %s474 = sld [smem:[#allocation5 + %s473]]
        %s475 = scalar_lea.vmem %s2, %s474
        %s476 = scalar_lea.vmem [#allocation2], %s472
        %p478 = scmp.lt.u32.totalorder 1, 8
        %p479 = pneg %p478
        // Predicated region
        $region191: #{tpu_custom_call.1} parent=39 // pred_check
          _
        $region192: #{tpu_custom_call.1} parent=39 // pred_check_branch
          %481 = sbr.rel (%p478) target = $region194
        $region193: #{tpu_custom_call.1} parent=39 // pred_region
          %s496 = sand.u32 1, 7
          %p497 = scmp.eq.s32.totalorder %s496, 0
          %p498 = pneg %p497
          // Predicated region
          $region206: #{tpu_custom_call.1} parent=193 // pred_check
            _
          $region207: #{tpu_custom_call.1} parent=193 // pred_check_branch
            %500 = sbr.rel (%p497) target = $region209
          $region208: #{tpu_custom_call.1} parent=193 // pred_region
            %s501 = sand.u32 1, 7
            %s502 = ssub.s32 1, %s501
            %s503 = scalar_lea.vmem %s475, %s502
            %s504 = ssub.s32 1, %s501
            %s505 = scalar_lea.vmem %s476, %s504 [#allocation2]
            %s506 = sshllo.u32 0, %s501
            loop: start=0, step=1, limit=1
            $region210: #{tpu_custom_call.1} parent=208 // loop_pre_header
              _
            $region211: #{tpu_custom_call.1} parent=208 // loop_header
              %s508 = sphi 0, %s512
              %p509 = scmp.ge.s32.totalorder %s508, 1
              %s513 = sphi %s503, %s503
              %s514 = sphi %s505, %s505
            $region212: #{tpu_custom_call.1} parent=208 // loop_header_branch
              %511 = sbr.rel (%p509) target = $region216
            $region213: #{tpu_custom_call.1} parent=208 // loop_body
              %v515 = vld [vmem:[%s513] sm:%s506]
              %516 = vst [vmem:[%s514] sm:%s506] %v515
            $region214: #{tpu_custom_call.1} parent=208 // loop_footer
              %s512 = sadd.s32 1, %s508
            $region215: #{tpu_custom_call.1} parent=208 // loop_footer_branch
              %507 = sbr.rel target = $region211
            $region216: #{tpu_custom_call.1} parent=208 // loop_exit
              _
          $region209: #{tpu_custom_call.1} parent=193 // pred_fallthru
            _
        $region194: #{tpu_custom_call.1} parent=39 // pred_fallthru
          _
        // Predicated region
        $region195: #{tpu_custom_call.1} parent=39 // pred_check
          %p482 = pneg %p478
        $region196: #{tpu_custom_call.1} parent=39 // pred_check_branch
          %484 = sbr.rel (%p482) target = $region198
        $region197: #{tpu_custom_call.1} parent=39 // pred_region
          %s485 = sshllo.u32 0, 1
          loop: start=0, step=1, limit=1
          $region199: #{tpu_custom_call.1} parent=197 // loop_pre_header
            _
          $region200: #{tpu_custom_call.1} parent=197 // loop_header
            %s487 = sphi 0, %s491
            %p488 = scmp.ge.s32.totalorder %s487, 1
            %s492 = sphi %s475, %s475
            %s493 = sphi %s476, %s476
          $region201: #{tpu_custom_call.1} parent=197 // loop_header_branch
            %490 = sbr.rel (%p488) target = $region205
          $region202: #{tpu_custom_call.1} parent=197 // loop_body
            %v494 = vld [vmem:[%s492] sm:%s485]
            %495 = vst [vmem:[%s493] sm:%s485] %v494
          $region203: #{tpu_custom_call.1} parent=197 // loop_footer
            %s491 = sadd.s32 1, %s487
          $region204: #{tpu_custom_call.1} parent=197 // loop_footer_branch
            %486 = sbr.rel target = $region200
          $region205: #{tpu_custom_call.1} parent=197 // loop_exit
            _
        $region198: #{tpu_custom_call.1} parent=39 // pred_fallthru
          _
        // Predicated region
        $region217: #{tpu_custom_call.1} parent=39 // pred_check
          _
        $region218: #{tpu_custom_call.1} parent=39 // pred_check_branch
          %519 = sbr.rel (0) target = $region220
        $region219: #{tpu_custom_call.1} parent=39 // pred_region
          %520 = vsyncadd [#allocation3], 16
        $region220: #{tpu_custom_call.1} parent=39 // pred_fallthru
          _
        %s521 = sadd.s32 0, 6
        %s522 = sadd.s32 %s228, %s521
        %s523 = sld [smem:[#allocation5 + %s522]]
        %s524 = scalar_lea.vmem %s2, %s523
        %s525 = scalar_lea.vmem [#allocation2], %s521
        %p527 = scmp.lt.u32.totalorder 1, 8
        %p528 = pneg %p527
        // Predicated region
        $region221: #{tpu_custom_call.1} parent=39 // pred_check
          _
        $region222: #{tpu_custom_call.1} parent=39 // pred_check_branch
          %530 = sbr.rel (%p527) target = $region224
        $region223: #{tpu_custom_call.1} parent=39 // pred_region
          %s545 = sand.u32 1, 7
          %p546 = scmp.eq.s32.totalorder %s545, 0
          %p547 = pneg %p546
          // Predicated region
          $region236: #{tpu_custom_call.1} parent=223 // pred_check
            _
          $region237: #{tpu_custom_call.1} parent=223 // pred_check_branch
            %549 = sbr.rel (%p546) target = $region239
          $region238: #{tpu_custom_call.1} parent=223 // pred_region
            %s550 = sand.u32 1, 7
            %s551 = ssub.s32 1, %s550
            %s552 = scalar_lea.vmem %s524, %s551
            %s553 = ssub.s32 1, %s550
            %s554 = scalar_lea.vmem %s525, %s553 [#allocation2]
            %s555 = sshllo.u32 0, %s550
            loop: start=0, step=1, limit=1
            $region240: #{tpu_custom_call.1} parent=238 // loop_pre_header
              _
            $region241: #{tpu_custom_call.1} parent=238 // loop_header
              %s557 = sphi 0, %s561
              %p558 = scmp.ge.s32.totalorder %s557, 1
              %s562 = sphi %s552, %s552
              %s563 = sphi %s554, %s554
            $region242: #{tpu_custom_call.1} parent=238 // loop_header_branch
              %560 = sbr.rel (%p558) target = $region246
            $region243: #{tpu_custom_call.1} parent=238 // loop_body
              %v564 = vld [vmem:[%s562] sm:%s555]
              %565 = vst [vmem:[%s563] sm:%s555] %v564
            $region244: #{tpu_custom_call.1} parent=238 // loop_footer
              %s561 = sadd.s32 1, %s557
            $region245: #{tpu_custom_call.1} parent=238 // loop_footer_branch
              %556 = sbr.rel target = $region241
            $region246: #{tpu_custom_call.1} parent=238 // loop_exit
              _
          $region239: #{tpu_custom_call.1} parent=223 // pred_fallthru
            _
        $region224: #{tpu_custom_call.1} parent=39 // pred_fallthru
          _
        // Predicated region
        $region225: #{tpu_custom_call.1} parent=39 // pred_check
          %p531 = pneg %p527
        $region226: #{tpu_custom_call.1} parent=39 // pred_check_branch
          %533 = sbr.rel (%p531) target = $region228
        $region227: #{tpu_custom_call.1} parent=39 // pred_region
          %s534 = sshllo.u32 0, 1
          loop: start=0, step=1, limit=1
          $region229: #{tpu_custom_call.1} parent=227 // loop_pre_header
            _
          $region230: #{tpu_custom_call.1} parent=227 // loop_header
            %s536 = sphi 0, %s540
            %p537 = scmp.ge.s32.totalorder %s536, 1
            %s541 = sphi %s524, %s524
            %s542 = sphi %s525, %s525
          $region231: #{tpu_custom_call.1} parent=227 // loop_header_branch
            %539 = sbr.rel (%p537) target = $region235
          $region232: #{tpu_custom_call.1} parent=227 // loop_body
            %v543 = vld [vmem:[%s541] sm:%s534]
            %544 = vst [vmem:[%s542] sm:%s534] %v543
          $region233: #{tpu_custom_call.1} parent=227 // loop_footer
            %s540 = sadd.s32 1, %s536
          $region234: #{tpu_custom_call.1} parent=227 // loop_footer_branch
            %535 = sbr.rel target = $region230
          $region235: #{tpu_custom_call.1} parent=227 // loop_exit
            _
        $region228: #{tpu_custom_call.1} parent=39 // pred_fallthru
          _
        // Predicated region
        $region247: #{tpu_custom_call.1} parent=39 // pred_check
          _
        $region248: #{tpu_custom_call.1} parent=39 // pred_check_branch
          %568 = sbr.rel (0) target = $region250
        $region249: #{tpu_custom_call.1} parent=39 // pred_region
          %569 = vsyncadd [#allocation3], 16
        $region250: #{tpu_custom_call.1} parent=39 // pred_fallthru
          _
        %s570 = sadd.s32 0, 7
        %s571 = sadd.s32 %s228, %s570
        %s572 = sld [smem:[#allocation5 + %s571]]
        %s573 = scalar_lea.vmem %s2, %s572
        %s574 = scalar_lea.vmem [#allocation2], %s570
        %p576 = scmp.lt.u32.totalorder 1, 8
        %p577 = pneg %p576
        // Predicated region
        $region251: #{tpu_custom_call.1} parent=39 // pred_check
          _
        $region252: #{tpu_custom_call.1} parent=39 // pred_check_branch
          %579 = sbr.rel (%p576) target = $region254
        $region253: #{tpu_custom_call.1} parent=39 // pred_region
          %s594 = sand.u32 1, 7
          %p595 = scmp.eq.s32.totalorder %s594, 0
          %p596 = pneg %p595
          // Predicated region
          $region266: #{tpu_custom_call.1} parent=253 // pred_check
            _
          $region267: #{tpu_custom_call.1} parent=253 // pred_check_branch
            %598 = sbr.rel (%p595) target = $region269
          $region268: #{tpu_custom_call.1} parent=253 // pred_region
            %s599 = sand.u32 1, 7
            %s600 = ssub.s32 1, %s599
            %s601 = scalar_lea.vmem %s573, %s600
            %s602 = ssub.s32 1, %s599
            %s603 = scalar_lea.vmem %s574, %s602 [#allocation2]
            %s604 = sshllo.u32 0, %s599
            loop: start=0, step=1, limit=1
            $region270: #{tpu_custom_call.1} parent=268 // loop_pre_header
              _
            $region271: #{tpu_custom_call.1} parent=268 // loop_header
              %s606 = sphi 0, %s610
              %p607 = scmp.ge.s32.totalorder %s606, 1
              %s611 = sphi %s601, %s601
              %s612 = sphi %s603, %s603
            $region272: #{tpu_custom_call.1} parent=268 // loop_header_branch
              %609 = sbr.rel (%p607) target = $region276
            $region273: #{tpu_custom_call.1} parent=268 // loop_body
              %v613 = vld [vmem:[%s611] sm:%s604]
              %614 = vst [vmem:[%s612] sm:%s604] %v613
            $region274: #{tpu_custom_call.1} parent=268 // loop_footer
              %s610 = sadd.s32 1, %s606
            $region275: #{tpu_custom_call.1} parent=268 // loop_footer_branch
              %605 = sbr.rel target = $region271
            $region276: #{tpu_custom_call.1} parent=268 // loop_exit
              _
          $region269: #{tpu_custom_call.1} parent=253 // pred_fallthru
            _
        $region254: #{tpu_custom_call.1} parent=39 // pred_fallthru
          _
        // Predicated region
        $region255: #{tpu_custom_call.1} parent=39 // pred_check
          %p580 = pneg %p576
        $region256: #{tpu_custom_call.1} parent=39 // pred_check_branch
          %582 = sbr.rel (%p580) target = $region258
        $region257: #{tpu_custom_call.1} parent=39 // pred_region
          %s583 = sshllo.u32 0, 1
          loop: start=0, step=1, limit=1
          $region259: #{tpu_custom_call.1} parent=257 // loop_pre_header
            _
          $region260: #{tpu_custom_call.1} parent=257 // loop_header
            %s585 = sphi 0, %s589
            %p586 = scmp.ge.s32.totalorder %s585, 1
            %s590 = sphi %s573, %s573
            %s591 = sphi %s574, %s574
          $region261: #{tpu_custom_call.1} parent=257 // loop_header_branch
            %588 = sbr.rel (%p586) target = $region265
          $region262: #{tpu_custom_call.1} parent=257 // loop_body
            %v592 = vld [vmem:[%s590] sm:%s583]
            %593 = vst [vmem:[%s591] sm:%s583] %v592
          $region263: #{tpu_custom_call.1} parent=257 // loop_footer
            %s589 = sadd.s32 1, %s585
          $region264: #{tpu_custom_call.1} parent=257 // loop_footer_branch
            %584 = sbr.rel target = $region260
          $region265: #{tpu_custom_call.1} parent=257 // loop_exit
            _
        $region258: #{tpu_custom_call.1} parent=39 // pred_fallthru
          _
        // Predicated region
        $region277: #{tpu_custom_call.1} parent=39 // pred_check
          _
        $region278: #{tpu_custom_call.1} parent=39 // pred_check_branch
          %617 = sbr.rel (0) target = $region280
        $region279: #{tpu_custom_call.1} parent=39 // pred_region
          %618 = vsyncadd [#allocation3], 16
        $region280: #{tpu_custom_call.1} parent=39 // pred_fallthru
          _
        %s619 = smul.u32 8, 1
        %s620 = sshll.u32 %s619, 4
        %621 = dma.done [#allocation3], %s620
        %v622 = vld [vmem:[#allocation2] sm:$0xff]
        %v623 = vld [vmem:[%s3] sm:$0xff]
        %v624 = vld [vmem:[%s227] sm:$0xff]
        %v625 = vld [vmem:[%s4] sm:$0x1]
        %v626 = vlaneseq
        %v627 = vshrl.u32 %v626, 7
        %v628 = vsub.s32 0, %v627
        %v629 = vrot.slane %v625, %v628
        %vm630 = vcmp.eq.s32.totalorder %v624, 1
        %v631 = vld [vmem:[%s4 + $0x1] sm:$0x1]
        %v632 = vsel %vm630, 1, 0
        %633 = vset.pattern.permute.xlu0 0
        %634 = vperm.xlu0 %633, %v632
        %v635 = vpop.permute.xlu0 %634
        %vm636 = vcmp.eq.s32.totalorder %v635, 1
        %v637 = vlaneseq
        %v638 = vshrl.u32 %v637, 7
        %v639 = vsub.s32 0, %v638
        %v640 = vrot.slane %v631, %v639
        %v641 = vsel %vm636, %v640, %v629
        %v642 = vadd.f32 %v622, %v623
        %v643 = vadd.f32 %v642, %v641
        %vm644 = vcmask 261120
        %v645 = vsel %vm644, %v643, 0.0
        %646 = vadd.xlane.f32.xlu0 %v645
        %v647 = vpop.xlane.xlu0 %646
        %v648 = vrcp.pop 32.0
        %v649 = vmul.f32 %v647, %v648
        %v650 = vsub.f32 %v643, %v649
        %v651 = vmul.f32 %v650, %v650
        %v652 = vsel %vm644, %v651, 0.0
        %653 = vadd.xlane.f32.xlu0 %v652
        %v654 = vpop.xlane.xlu0 %653
        %v655 = vmul.f32 %v654, %v648
        %v656 = vadd.f32 %v655, 1e-12
        %v657 = vrsqrt.pop %v656
        %v658 = vmul.f32 %v650, %v657
        %v659 = vld [vmem:[%s5] sm:$0x1]
        %v661 = vlaneseq
        %v662 = vshrl.u32 %v661, 7
        %v663 = vsub.s32 0, %v662
        %v664 = vrot.slane %v659, %v663
        %v666 = vmul.f32 %v664, %v658
        %v667 = vld [vmem:[%s6] sm:$0x1]
        %v669 = vlaneseq
        %v670 = vshrl.u32 %v669, 7
        %v671 = vsub.s32 0, %v670
        %v672 = vrot.slane %v667, %v671
        %v674 = vadd.f32 %v666, %v672
        %675 = vst.msk [vmem:[%s223] sm:$0xff] %vm644, %v674
        %s676 = sand.u32 %s145, 1
        %s677 = scalar_lea.sflag [#allocation7], %s676
        %s678 = sand.u32 %s145, 1
        %s679 = smul.addr %s678, 8
        %s680 = scalar_lea.vmem [#allocation6], %s679
        // Predicated region
        $region281: #{tpu_custom_call.1} parent=39 // pred_check
          %p681 = pneg %p155
        $region282: #{tpu_custom_call.1} parent=39 // pred_check_branch
          %683 = sbr.rel (%p681) target = $region284
        $region283: #{tpu_custom_call.1} parent=39 // pred_region
          %s685 = ssub.s32 128, 128
          %686 = vsyncadd %s677, %s685
          %s687 = smul.addr %s27, 128
          %s688 = scalar_lea.hbm %s7, %s687
          %s690 = sshll.u32 %s680, 4
          %s691 = int_to_ptr.vmem [resolvable:$true] %s690
          %693 = dma.vmem_to_hbm [thread:$0]  %s691, 128, %s688, %s677
        $region284: #{tpu_custom_call.1} parent=39 // pred_fallthru
          _
      $region40: #{tpu_custom_call.1} parent=5 // pred_fallthru
        _
      %p694 = scmp.le.s32.totalorder 2, %s22
      // Predicated region
      $region285: #{tpu_custom_call.1} parent=5 // pred_check
        %p695 = pneg %p694
      $region286: #{tpu_custom_call.1} parent=5 // pred_check_branch
        %697 = sbr.rel (%p695) target = $region288
      $region287: #{tpu_custom_call.1} parent=5 // pred_region
        %s698 = ssub.s32 %s22, 2
        // Predicated region
        $region289: #{tpu_custom_call.1} parent=287 // pred_check
          %p699 = pneg %p161
        $region290: #{tpu_custom_call.1} parent=287 // pred_check_branch
          %701 = sbr.rel (%p699) target = $region292
        $region291: #{tpu_custom_call.1} parent=287 // pred_region
          %s702 = sand.u32 %s146, 1
          %s703 = scalar_lea.sflag [#allocation7], %s702
          %s704 = sand.u32 %s146, 1
          %s705 = smul.addr %s704, 8
          %s706 = scalar_lea.vmem [#allocation6], %s705
          %707 = dma.done %s703, 128
        $region292: #{tpu_custom_call.1} parent=287 // pred_fallthru
          _
      $region288: #{tpu_custom_call.1} parent=5 // pred_fallthru
        _
    $region6: #{tpu_custom_call.1} parent=1 // loop_footer
      %s26 = sadd.s32 1, %s22
    $region7: #{tpu_custom_call.1} parent=1 // loop_footer_branch
      %21 = sbr.rel target = $region3
    $region8: #{tpu_custom_call.1} parent=1 // loop_exit
      _
    %708 = vsyncpa [#allocation7], 1
    %s709 = scalar_lea.sflag [#allocation7], 1
    %710 = vsyncpa %s709, 1
  %711 = vsyncmov [#allocation3]
  %s712 = vpop.sfrf %711
  %p713 = scmp.eq.s32.totalorder %s712, 0
  %p714 = pneg %p713
  %716 = shalt.err (%p714)

</llo_original>
